<compile_context>
chip_gen: v7x
topology: tpu7x:2x2x1
jax: 0.10.0
libtpu: 0.0.40
codegen_flags: <defaults>
</compile_context>

<pallas_src>
import math

import jax
import jax.numpy as jnp
from jax.experimental import pallas as pl
from jax.experimental.pallas import tpu as pltpu


# Per-block input budget.  With the matching output block and Pallas' default
# double buffering the live footprint is ~4x this (= 16 MiB), which is why
# vmem_limit_bytes is set explicitly below: the scoped-VMEM default is only
# 16 MiB on v5e and 32 MiB on v6e/v7x.  48 MiB stays under every generation's
# physical VMEM (v7x: 64 MiB, v5e/v6e: 128 MiB).
_DEFAULT_MAX_BLOCK_BYTES = 4 * 1024 * 1024
_DEFAULT_VMEM_LIMIT_BYTES = 48 * 1024 * 1024
# Arrays larger than this are forced onto >= 2 grid steps so that
# dimension_semantics=("parallel",) can shard them across v7x's 2 TensorCores.
_SPLIT_THRESHOLD_BYTES = 1 * 1024 * 1024


def _min_sublane_rows(dtype) -> int:
    """Minimum legal sublane tile for a dtype: 8 (f32), 16 (bf16), 32 (int8)."""
    itemsize = jnp.dtype(dtype).itemsize
    return 8 * max(4 // max(itemsize, 1), 1)


def _apply_kernel(func):
    def kernel(x_ref, o_ref):
        y = func(x_ref[...])
        if y.dtype != o_ref.dtype:       # trace-time check: no cast if dtypes match
            y = y.astype(o_ref.dtype)
        o_ref[...] = y
    return kernel


def _choose_tile_rows(rows, row_bytes, min_rows, max_block_bytes):
    """Pick tile_rows such that:
       * each block stays under max_block_bytes,
       * arrays > _SPLIT_THRESHOLD_BYTES get >= 2 (preferably even, balanced)
         grid steps so both v7x TensorCores get work,
       * tiny partial last blocks are avoided when possible,
       * tile_rows is a multiple of min_rows or equals the full row extent."""
    total_bytes = rows * row_bytes
    budget_rows = max(max_block_bytes // row_bytes, min_rows)

    # Tiny arrays (per-step overhead dominates) or too few rows to split:
    # one full-extent block (always a legal block shape).
    if rows <= budget_rows and (total_bytes <= _SPLIT_THRESHOLD_BYTES
                                or rows < 2 * min_rows):
        return rows

    max_tile = min(budget_rows, rows)
    max_tile = max((max_tile // min_rows) * min_rows, min_rows)

    min_steps = max(2, pl.cdiv(rows, max_tile))
    best_score, best_tile = None, max_tile
    for steps in range(min_steps, min_steps + 16):
        tile = pl.cdiv(rows, steps)
        tile = pl.cdiv(tile, min_rows) * min_rows      # round up to a legal tile
        if tile > max_tile:
            continue
        n = pl.cdiv(rows, tile)
        tail = rows - (n - 1) * tile
        score = (
            tail == tile,        # exact divisor: no masked partial last block
            n % 2 == 0,          # even step count: balanced across 2 TCs (v7x)
            2 * tail >= tile,    # otherwise at least a half-sized tail
            -n,                  # fewer steps: less ~0.35us per-step overhead
        )
        if best_score is None or score > best_score:
            best_score, best_tile = score, tile
    return best_tile


def _launch_rowtiled(func, x2, out_dtype, max_block_bytes, vmem_limit_bytes):
    """Row-tiled pipelined launch of an elementwise func on a 2D view.
    Returns None if the minimal legal block cannot fit the VMEM budget."""
    rows, cols = x2.shape
    itemsize = max(jnp.dtype(x2.dtype).itemsize, jnp.dtype(out_dtype).itemsize)
    min_rows = max(_min_sublane_rows(x2.dtype), _min_sublane_rows(out_dtype))
    row_bytes = cols * itemsize

    tile_rows = _choose_tile_rows(rows, row_bytes, min_rows, max_block_bytes)

    # Conservative footprint: (in + out) blocks, double-buffered.
    footprint = 2 * 2 * tile_rows * row_bytes
    if footprint > vmem_limit_bytes - (4 << 20):
        return None

    grid = (pl.cdiv(rows, tile_rows),)
    return pl.pallas_call(
        _apply_kernel(func),
        grid=grid,
        in_specs=[pl.BlockSpec((tile_rows, cols), lambda i: (i, 0))],
        out_specs=pl.BlockSpec((tile_rows, cols), lambda i: (i, 0)),
        out_shape=jax.ShapeDtypeStruct((rows, cols), out_dtype),
        compiler_params=pltpu.CompilerParams(
            # Row tiles are independent -> shard across v7x's 2 TensorCores.
            dimension_semantics=("parallel",),
            vmem_limit_bytes=vmem_limit_bytes,
        ),
    )(x2)


def _run_whole_array(func, x, vmem_limit_bytes):
    """Non-elementwise lambdas: run on the ORIGINAL shape in a single block so
    axis semantics are preserved.  Guarded by a VMEM-size check."""
    out_aval = jax.eval_shape(func, jax.ShapeDtypeStruct(x.shape, x.dtype))
    in_bytes = x.size * jnp.dtype(x.dtype).itemsize
    out_bytes = math.prod(out_aval.shape) * jnp.dtype(out_aval.dtype).itemsize
    if 2 * (in_bytes + out_bytes) > vmem_limit_bytes - (4 << 20):
        # TODO(synk): no generic tiling exists for an unknown non-elementwise
        # lambda on a >VMEM array; apply func directly in JAX for correctness.
        return func(x)

    in_ndim = x.ndim
    out_ndim = len(out_aval.shape)
    return pl.pallas_call(
        _apply_kernel(func),
        grid=(1,),
        in_specs=[pl.BlockSpec(x.shape, lambda i, n=in_ndim: (0,) * n)],
        out_specs=pl.BlockSpec(out_aval.shape, lambda i, n=out_ndim: (0,) * n),
        out_shape=jax.ShapeDtypeStruct(out_aval.shape, out_aval.dtype),
        compiler_params=pltpu.CompilerParams(vmem_limit_bytes=vmem_limit_bytes),
    )(x)


def _run_elementwise(func, x, max_block_bytes, vmem_limit_bytes):
    """Apply an elementwise func via a row-tiled, pipelined Pallas kernel."""
    total = x.size
    if total == 0:
        return func(x)

    lanes = None
    for cand in (4096, 2048, 1024, 512, 256, 128):
        if total % cand == 0:
            lanes = cand
            break

    if lanes is not None:
        # Lane-dense 2D view (metadata-only reshape in the wrapper).
        x2 = x.reshape(total // lanes, lanes)
    else:
        # Element count not a multiple of 128: keep the last dim as full
        # extent (legal for any width) and row-tile the collapsed leading
        # dims.  Still a pipelined, tiled kernel -- no untiled fallback.
        x2 = x.reshape(-1, x.shape[-1]) if x.ndim >= 2 else x.reshape(1, -1)

    out_aval = jax.eval_shape(func, jax.ShapeDtypeStruct(x2.shape, x2.dtype))
    if out_aval.shape != x2.shape:
        # Declared elementwise but changes shape on the collapsed view: be
        # safe and run untiled on the original shape.
        return _run_whole_array(func, x, vmem_limit_bytes)

    y2 = _launch_rowtiled(func, x2, out_aval.dtype, max_block_bytes,
                          vmem_limit_bytes)
    if y2 is None:
        # TODO(synk): pathological row width exceeds the VMEM budget even at
        # the minimal legal tile; apply func directly in JAX.
        return func(x)
    return y2.reshape(x.shape)


class PallasLambda:
    """Pallas-backed equivalent of torch `Lambda(func)`: forward(x) == func(x).

    shape_only=True    : func is a pure layout op (e.g. the flatten lambda
                         `x.view(x.size(0), -1)`).  Applied directly in JAX.
    elementwise=True   : func maps each element independently (activations,
                         scaling, casts, ...).  Runs in a lane-dense,
                         row-tiled, pipelined Pallas kernel.
    elementwise=False  : func may mix elements across axes (softmax, per-row
                         norm, ...).  Runs untiled on the original shape so
                         axis semantics are preserved (shape equality on a
                         reshaped view is NOT proof of elementwise-ness).
    """

    def __init__(self, func, shape_only=False, elementwise=True,
                 max_block_bytes=_DEFAULT_MAX_BLOCK_BYTES,
                 vmem_limit_bytes=_DEFAULT_VMEM_LIMIT_BYTES):
        self.func = func
        self.shape_only = shape_only
        self.elementwise = elementwise
        self.max_block_bytes = max_block_bytes
        self.vmem_limit_bytes = vmem_limit_bytes

    def __call__(self, x):
        if self.shape_only:
            return self.func(x)
        if self.elementwise:
            return _run_elementwise(self.func, x, self.max_block_bytes,
                                    self.vmem_limit_bytes)
        return _run_whole_array(self.func, x, self.vmem_limit_bytes)


if __name__ == "__main__":
    key = jax.random.PRNGKey(0)
    k0, k1, k2, k3, k4 = jax.random.split(key, 5)

    # Small NCHW input consistent with a conv feature map feeding a flatten.
    x = jax.random.normal(k0, (2, 4, 16, 16), dtype=jnp.float32)

    # 1) canonical flower use: Lambda(lambda x: x.view(x.size(0), -1))
    #    shape-only -> no kernel; reshape is a free metadata op in XLA.
    flatten = PallasLambda(lambda t: t.reshape(t.shape[0], -1), shape_only=True)
    y = flatten(x)
    jax.block_until_ready(y)
    assert y.shape == (2, 4 * 16 * 16)
    assert jnp.array_equal(y, x.reshape(x.shape[0], -1))

    # 2) elementwise compute lambda: Lambda(gelu) -> lane-dense Pallas kernel.
    gelu = PallasLambda(jax.nn.gelu)
    z = gelu(x)
    jax.block_until_ready(z)
    assert z.shape == x.shape
    assert jnp.allclose(z, jax.nn.gelu(x), atol=1e-5, rtol=1e-5)

    # 3) multi-step grid with 2 balanced full blocks (megacore-friendly):
    #    (64,1024) f32 collapses to (16,4096); 64 KiB budget -> tile_rows=8,
    #    grid=(2,), no partial block.
    xb = jax.random.normal(k1, (64, 1024), dtype=jnp.float32)
    tanh2 = PallasLambda(lambda t: jnp.tanh(t) * 2.0, max_block_bytes=64 * 1024)
    zb = tanh2(xb)
    jax.block_until_ready(zb)
    assert zb.shape == xb.shape
    assert jnp.allclose(zb, jnp.tanh(xb) * 2.0, atol=1e-5, rtol=1e-5)

    # 4) multi-step grid with a partial (masked) last block:
    #    (40,1024) f32 -> (10,4096); 8 KiB budget -> tile_rows=8, grid=(2,),
    #    last block has 2 valid rows.
    xc = jax.random.normal(k2, (40, 1024), dtype=jnp.float32)
    relu = PallasLambda(lambda t: jnp.maximum(t, 0.0), max_block_bytes=8 * 1024)
    zc = relu(xc)
    jax.block_until_ready(zc)
    assert jnp.array_equal(zc, jnp.maximum(xc, 0.0))

    # 5) element count NOT a multiple of 128: tiled full-extent-last-dim path.
    xd = jax.random.normal(k3, (20, 65), dtype=jnp.float32)
    sig = PallasLambda(jax.nn.sigmoid)
    zd = sig(xd)
    jax.block_until_ready(zd)
    assert zd.shape == xd.shape
    assert jnp.allclose(zd, jax.nn.sigmoid(xd), atol=1e-5, rtol=1e-5)

    # 6) non-elementwise lambda must be declared: runs untiled on its original
    #    shape so the axis=-1 semantics are preserved (no scrambled view).
    xe = jax.random.normal(k4, (8, 128), dtype=jnp.float32)
    softmax = PallasLambda(lambda t: jax.nn.softmax(t, axis=-1),
                           elementwise=False)
    ze = softmax(xe)
    jax.block_until_ready(ze)
    assert jnp.allclose(ze, jax.nn.softmax(xe, axis=-1), atol=1e-5, rtol=1e-5)

    print("KERNEL_OK")
</pallas_src>

<mosaic_0001>
module attributes {stable_mosaic.version = 11 : i64} {
  func.func @kernel(%arg0: i32, %arg1: memref<1x2048xf32, #tpu.memory_space<vmem>>, %arg2: memref<1x2048xf32, #tpu.memory_space<vmem>>) attributes {dimension_semantics = [#tpu.dimension_semantics<parallel>], iteration_bounds = array<i64: 1>, scalar_prefetch = 0 : i64, scratch_operands = 0 : i64, tpu.core_type = #tpu.core_type<tc>, window_params = [{transform_indices = @transform_0, window_bounds = array<i64: 1, 2048>}, {transform_indices = @transform_1, window_bounds = array<i64: 1, 2048>}]} {
    %c0 = arith.constant 0 : index
    %c0_0 = arith.constant 0 : index
    %0 = vector.load %arg1[%c0, %c0_0] : memref<1x2048xf32, #tpu.memory_space<vmem>>, vector<1x2048xf32>
    %1 = arith.mulf %0, %0 : vector<1x2048xf32>
    %2 = arith.mulf %0, %1 : vector<1x2048xf32>
    %cst = arith.constant 4.471500e-02 : f32
    %3 = vector.broadcast %cst : f32 to vector<1x2048xf32>
    %4 = arith.mulf %3, %2 : vector<1x2048xf32>
    %5 = arith.addf %0, %4 : vector<1x2048xf32>
    %cst_1 = arith.constant 0.797884583 : f32
    %6 = vector.broadcast %cst_1 : f32 to vector<1x2048xf32>
    %7 = arith.mulf %6, %5 : vector<1x2048xf32>
    %8 = math.tanh %7 : vector<1x2048xf32>
    %cst_2 = arith.constant 1.000000e+00 : f32
    %9 = vector.broadcast %cst_2 : f32 to vector<1x2048xf32>
    %10 = arith.addf %9, %8 : vector<1x2048xf32>
    %cst_3 = arith.constant 5.000000e-01 : f32
    %11 = vector.broadcast %cst_3 : f32 to vector<1x2048xf32>
    %12 = arith.mulf %11, %10 : vector<1x2048xf32>
    %13 = arith.mulf %0, %12 : vector<1x2048xf32>
    %c0_4 = arith.constant 0 : index
    %c0_5 = arith.constant 0 : index
    %14 = vector.load %arg2[%c0_4, %c0_5] : memref<1x2048xf32, #tpu.memory_space<vmem>>, vector<1x2048xf32>
    tpu.vector_store %arg2[%c0_4, %c0_5], %13 {strides = array<i32>} : memref<1x2048xf32, #tpu.memory_space<vmem>>, vector<1x2048xf32>,
    return
  }
  func.func @transform_0(%arg0: i32) -> (i32, i32) {
    %c0_i32 = arith.constant 0 : i32
    %c0_i32_0 = arith.constant 0 : i32
    return %arg0, %c0_i32 : i32, i32
  }
  func.func @transform_1(%arg0: i32) -> (i32, i32) {
    %c0_i32 = arith.constant 0 : i32
    %c0_i32_0 = arith.constant 0 : i32
    return %arg0, %c0_i32 : i32, i32
  }
}

</mosaic_0001>

<llo_original>
// kernel: tpu_custom_call.1
$region0: #{tpu_custom_call.1}
  #allocation0 [shape = 'u32[]', space=smem, size = 0x4, offset = 0x4, fixed_abs, tag = 'smem constant byte address 0x4 - core index']
  #allocation1 [shape = 'u32[144,128]{1,0:T(1,128)}', space=vmem, size = 0x12000, scoped, tag = 'internal scratch']
  %s0 = inlined_call_operand.hbm [shape: f32[1,2048], index: 0, kind: input, shape index: {}]
  %s1 = inlined_call_operand.hbm [shape: f32[1,2048], index: 1, kind: output, shape index: {}]
  %s2 = sld [smem:[#allocation0]]
  $region18: #{tpu_custom_call.1} parent=0
    _
  %s4 = ssub.s32 1, %s2
  %s5 = scalar_select 0, %s4, %s2
  $region1: #{tpu_custom_call.1} parent=0
    #allocation2 [shape = 'u8[8192]{0}', space=vmem, size = 0x2000, scoped, tag = 'input window, operand 0, single buffered']
    #allocation3 [shape = 's32[1]{0}', space=sflag, size = 0x4, scoped, tag = 'scoped memory for tpu_custom_call.1']
    #allocation4 [shape = 's32[1]{0}', space=sflag, size = 0x4, scoped, tag = 'scoped memory for tpu_custom_call.1']
    #allocation5 [shape = 'u8[8192]{0}', space=vmem, size = 0x2000, scoped, tag = 'output window, operand 0, single buffered']
    %6 = vsyncpa [#allocation3], 0
    %7 = vsyncpa [#allocation4], 0
    // Predicated region
    $region2: #{tpu_custom_call.1} parent=1 // pred_check
      _
    $region3: #{tpu_custom_call.1} parent=1 // pred_check_branch
      %9 = sbr.rel (0) target = $region5
    $region4: #{tpu_custom_call.1} parent=1 // pred_region
      %s11 = ssub.s32 256, 256
      %12 = vsyncadd [#allocation3], %s11
      %s14 = sshll.u32 [#allocation2], 4
      %s15 = int_to_ptr.vmem [resolvable:$true] %s14
      %17 = dma.hbm_to_vmem [thread:$0]  %s0, 256, %s15, [#allocation3]
    $region5: #{tpu_custom_call.1} parent=1 // pred_fallthru
      _
    // Predicated region
    $region6: #{tpu_custom_call.1} parent=1 // pred_check
      _
    $region7: #{tpu_custom_call.1} parent=1 // pred_check_branch
      %19 = sbr.rel (0) target = $region9
    $region8: #{tpu_custom_call.1} parent=1 // pred_region
      %20 = dma.done [#allocation3], 256
    $region9: #{tpu_custom_call.1} parent=1 // pred_fallthru
      _
    %v21 = vld [vmem:[#allocation2] sm:$0xff]
    %v22 = vld [vmem:[#allocation2 + $0x8] sm:$0xff]
    %v23 = vmul.f32 %v21, %v21
    %v24 = vmul.f32 %v22, %v22
    %v25 = vmul.f32 %v21, %v23
    %v26 = vmul.f32 %v22, %v24
    %v27 = vmul.f32 %v25, 0.044715
    %v28 = vmul.f32 %v26, 0.044715
    %v29 = vadd.f32 %v21, %v27
    %v30 = vadd.f32 %v22, %v28
    %v31 = vmul.f32 %v29, 0.7978846
    %v32 = vmul.f32 %v30, 0.7978846
    %v33 = vtanh.pop %v31
    %v34 = vtanh.pop %v32
    %v35 = vadd.f32 %v33, 1.0
    %v36 = vadd.f32 %v34, 1.0
    %v37 = vmul.f32 %v35, 0.5
    %v38 = vmul.f32 %v36, 0.5
    %v39 = vmul.f32 %v21, %v37
    %v40 = vmul.f32 %v22, %v38
    %41 = vst [vmem:[#allocation5] sm:$0xff] %v39
    %42 = vst [vmem:[#allocation5 + $0x8] sm:$0xff] %v40
    // Predicated region
    $region10: #{tpu_custom_call.1} parent=1 // pred_check
      _
    $region11: #{tpu_custom_call.1} parent=1 // pred_check_branch
      %44 = sbr.rel (0) target = $region13
    $region12: #{tpu_custom_call.1} parent=1 // pred_region
      %s46 = ssub.s32 256, 256
      %47 = vsyncadd [#allocation4], %s46
      %s49 = sshll.u32 [#allocation5], 4
      %s50 = int_to_ptr.vmem [resolvable:$true] %s49
      %52 = dma.vmem_to_hbm [thread:$0]  %s50, 256, %s1, [#allocation4]
    $region13: #{tpu_custom_call.1} parent=1 // pred_fallthru
      _
    // Predicated region
    $region14: #{tpu_custom_call.1} parent=1 // pred_check
      _
    $region15: #{tpu_custom_call.1} parent=1 // pred_check_branch
      %54 = sbr.rel (0) target = $region17
    $region16: #{tpu_custom_call.1} parent=1 // pred_region
      %55 = dma.done [#allocation4], 256
    $region17: #{tpu_custom_call.1} parent=1 // pred_fallthru
      _
    %56 = vsyncpa [#allocation3], 1
    %57 = vsyncpa [#allocation4], 1

</llo_original>
